<compile_context>
chip_gen: v5e
topology: v5e:2x2
jax: 0.10.0
libtpu: 0.0.40
codegen_flags: <defaults>
</compile_context>

<pallas_src>
import functools

import jax
import jax.numpy as jnp
from jax.experimental import pallas as pl
from jax.experimental.pallas import tpu as pltpu


# ---------------------------------------------------------------------------
# Kernel
# ---------------------------------------------------------------------------
def sae_kernel(x_ref,
               w1_ref, b1_ref,
               w2_ref, b2_ref,
               w3_ref, b3_ref,
               w4_ref, b4_ref,
               o_ref):
    # x / w1 / w4 may be bf16; accumulate in f32 on the MXU, do sigmoid in f32.
    x = x_ref[...]
    h1 = jax.nn.sigmoid(
        jnp.dot(x, w1_ref[...], preferred_element_type=jnp.float32) + b1_ref[...])
    h2 = jax.nn.sigmoid(
        jnp.dot(h1, w2_ref[...], preferred_element_type=jnp.float32) + b2_ref[...])
    h3 = jax.nn.sigmoid(
        jnp.dot(h2, w3_ref[...], preferred_element_type=jnp.float32) + b3_ref[...])
    out = jnp.dot(h3.astype(w4_ref.dtype), w4_ref[...],
                  preferred_element_type=jnp.float32) + b4_ref[...]
    o_ref[...] = out.astype(o_ref.dtype)


# ---------------------------------------------------------------------------
# Wrapper
# ---------------------------------------------------------------------------
_LANE = 128
_SUBLANE = 8
_HID_PAD = 128                        # hidden dims 20/10/20 -> 128
_VMEM_TILE_BUDGET = 24 * 1024 * 1024  # double-buffered x+out tiles
_VMEM_LIMIT_BYTES = 56 * 1024 * 1024  # scoped VMEM limit, safe on v7x (64 MiB)


def _round_up(n, m):
    return ((n + m - 1) // m) * m


def _pad2(a, rows, cols):
    return jnp.pad(a, ((0, rows - a.shape[0]), (0, cols - a.shape[1])))


def sae_forward(x, params, *, batch_tile=512, io_dtype=jnp.bfloat16):
    """x: [B, nb_movies] float32.  params: dict of unpadded (in, out) weights.

    Returns [B, nb_movies] in io_dtype.
    """
    B, nb_movies = x.shape
    F_pad = _round_up(nb_movies, _LANE)
    io_bytes = jnp.dtype(io_dtype).itemsize

    # --- batch tile: large, multiple of 8, capped by VMEM budget ---------
    bt = _round_up(min(batch_tile, B), _SUBLANE)
    # 2 streams (x, out) x 2 pipeline buffers each.
    while 4 * bt * F_pad * io_bytes > _VMEM_TILE_BUDGET and bt > _SUBLANE:
        bt = max(_SUBLANE, _round_up(bt // 2, _SUBLANE))
    B_pad = _round_up(B, bt)
    grid = (B_pad // bt,)

    # --- pad + cast inputs / params (zero padding keeps the math exact) --
    x_p = _pad2(x, B_pad, F_pad).astype(io_dtype)

    w1 = _pad2(params["w1"], F_pad, _HID_PAD).astype(io_dtype)      # big
    b1 = _pad2(params["b1"], 1, _HID_PAD)
    w2 = _pad2(params["w2"], _HID_PAD, _HID_PAD)                    # tiny, f32
    b2 = _pad2(params["b2"], 1, _HID_PAD)
    w3 = _pad2(params["w3"], _HID_PAD, _HID_PAD)                    # tiny, f32
    b3 = _pad2(params["b3"], 1, _HID_PAD)
    w4 = _pad2(params["w4"], _HID_PAD, F_pad).astype(io_dtype)      # big
    b4 = _pad2(params["b4"], 1, F_pad)

    def full_spec(arr):
        # Small weight/bias tensors: one full block, resident across the grid.
        return pl.BlockSpec(arr.shape, lambda i: (0, 0))

    weight_bytes = sum(int(a.size) * jnp.dtype(a.dtype).itemsize
                       for a in (w1, b1, w2, b2, w3, b3, w4, b4))
    cost = pl.CostEstimate(
        flops=int(2 * B_pad * (F_pad * _HID_PAD          # fc1
                               + _HID_PAD * _HID_PAD     # fc2
                               + _HID_PAD * _HID_PAD     # fc3
                               + _HID_PAD * F_pad)),     # fc4
        transcendentals=int(B_pad * 3 * _HID_PAD),
        bytes_accessed=int(2 * B_pad * F_pad * io_bytes + weight_bytes),
    )

    out_padded = pl.pallas_call(
        sae_kernel,
        out_shape=jax.ShapeDtypeStruct((B_pad, F_pad), io_dtype),
        grid_spec=pltpu.PrefetchScalarGridSpec(
            num_scalar_prefetch=0,
            grid=grid,
            in_specs=[
                pl.BlockSpec((bt, F_pad), lambda i: (i, 0)),   # x tile
                full_spec(w1), full_spec(b1),
                full_spec(w2), full_spec(b2),
                full_spec(w3), full_spec(b3),
                full_spec(w4), full_spec(b4),
            ],
            out_specs=pl.BlockSpec((bt, F_pad), lambda i: (i, 0)),
        ),
        compiler_params=pltpu.CompilerParams(
            dimension_semantics=("parallel",),
            vmem_limit_bytes=_VMEM_LIMIT_BYTES),
        cost_estimate=cost,
    )(x_p, w1, b1, w2, b2, w3, b3, w4, b4)

    return out_padded[:B, :nb_movies]


# ---------------------------------------------------------------------------
# Parameters & reference
# ---------------------------------------------------------------------------
def init_params(key, nb_movies):
    """Synthetic parameters matching the SAE layer shapes, stored (in, out)."""
    ks = jax.random.split(key, 8)

    def linear(kw, kb, fan_in, fan_out):
        # PyTorch default Linear init: U(-1/sqrt(fan_in), 1/sqrt(fan_in))
        bound = 1.0 / jnp.sqrt(jnp.float32(fan_in))
        w = jax.random.uniform(kw, (fan_in, fan_out), jnp.float32, -bound, bound)
        b = jax.random.uniform(kb, (1, fan_out), jnp.float32, -bound, bound)
        return w, b

    w1, b1 = linear(ks[0], ks[1], nb_movies, 20)
    w2, b2 = linear(ks[2], ks[3], 20, 10)
    w3, b3 = linear(ks[4], ks[5], 10, 20)
    w4, b4 = linear(ks[6], ks[7], 20, nb_movies)
    return dict(w1=w1, b1=b1, w2=w2, b2=b2, w3=w3, b3=b3, w4=w4, b4=b4)


def sae_reference(x, p):
    """Pure-JAX reference (unpadded, f32)."""
    h = jax.nn.sigmoid(x @ p["w1"] + p["b1"])
    h = jax.nn.sigmoid(h @ p["w2"] + p["b2"])
    h = jax.nn.sigmoid(h @ p["w3"] + p["b3"])
    return h @ p["w4"] + p["b4"]


# ---------------------------------------------------------------------------
# Test
# ---------------------------------------------------------------------------
if __name__ == "__main__":
    key = jax.random.PRNGKey(0)
    k_param, k_x = jax.random.split(key)

    nb_movies = 64   # synthetic "number of movies" (feature dim); padded to 128
    batch = 20       # deliberately not a multiple of 8 -> exercises batch padding

    params = init_params(k_param, nb_movies)
    # Synthetic ratings in [0, 5), MovieLens-style input.
    x = jax.random.uniform(k_x, (batch, nb_movies), jnp.float32, 0.0, 5.0)

    ref = sae_reference(x, params)

    # f32 I/O path: exact (up to f32 rounding) match with the reference.
    out_f32 = sae_forward(x, params, batch_tile=512, io_dtype=jnp.float32)
    out_f32 = jax.block_until_ready(out_f32)
    assert out_f32.shape == (batch, nb_movies)
    assert jnp.allclose(out_f32.astype(jnp.float32), ref, atol=1e-5, rtol=1e-5), \
        "f32 kernel mismatch vs reference"

    # bf16 I/O path (default, HBM-optimal): relaxed tolerance.
    out_bf16 = sae_forward(x, params, batch_tile=512, io_dtype=jnp.bfloat16)
    out_bf16 = jax.block_until_ready(out_bf16)
    assert out_bf16.shape == (batch, nb_movies)
    assert jnp.allclose(out_bf16.astype(jnp.float32), ref, atol=5e-2, rtol=5e-2), \
        "bf16 kernel mismatch vs reference"

    print("KERNEL_OK")
</pallas_src>

<mosaic_0001>
module attributes {stable_mosaic.version = 11 : i64} {
  func.func @sae_kernel(%arg0: i32, %arg1: memref<24x128xf32, #tpu.memory_space<vmem>>, %arg2: memref<128x128xf32, #tpu.memory_space<vmem>>, %arg3: memref<1x128xf32, #tpu.memory_space<vmem>>, %arg4: memref<128x128xf32, #tpu.memory_space<vmem>>, %arg5: memref<1x128xf32, #tpu.memory_space<vmem>>, %arg6: memref<128x128xf32, #tpu.memory_space<vmem>>, %arg7: memref<1x128xf32, #tpu.memory_space<vmem>>, %arg8: memref<128x128xf32, #tpu.memory_space<vmem>>, %arg9: memref<1x128xf32, #tpu.memory_space<vmem>>, %arg10: memref<24x128xf32, #tpu.memory_space<vmem>>) attributes {dimension_semantics = [#tpu.dimension_semantics<parallel>], iteration_bounds = array<i64: 1>, scalar_prefetch = 0 : i64, scratch_operands = 0 : i64, tpu.core_type = #tpu.core_type<tc>, window_params = [{transform_indices = @transform_0, window_bounds = array<i64: 24, 128>}, {pipeline_mode = #tpu.pipeline_mode<synchronous>, transform_indices = @transform_1, window_bounds = array<i64: 128, 128>}, {pipeline_mode = #tpu.pipeline_mode<synchronous>, transform_indices = @transform_2, window_bounds = array<i64: 1, 128>}, {pipeline_mode = #tpu.pipeline_mode<synchronous>, transform_indices = @transform_3, window_bounds = array<i64: 128, 128>}, {pipeline_mode = #tpu.pipeline_mode<synchronous>, transform_indices = @transform_4, window_bounds = array<i64: 1, 128>}, {pipeline_mode = #tpu.pipeline_mode<synchronous>, transform_indices = @transform_5, window_bounds = array<i64: 128, 128>}, {pipeline_mode = #tpu.pipeline_mode<synchronous>, transform_indices = @transform_6, window_bounds = array<i64: 1, 128>}, {pipeline_mode = #tpu.pipeline_mode<synchronous>, transform_indices = @transform_7, window_bounds = array<i64: 128, 128>}, {pipeline_mode = #tpu.pipeline_mode<synchronous>, transform_indices = @transform_8, window_bounds = array<i64: 1, 128>}, {transform_indices = @transform_9, window_bounds = array<i64: 24, 128>}]} {
    %c0 = arith.constant 0 : index
    %c0_0 = arith.constant 0 : index
    %0 = vector.load %arg1[%c0, %c0_0] : memref<24x128xf32, #tpu.memory_space<vmem>>, vector<24x128xf32>
    %c0_1 = arith.constant 0 : index
    %c0_2 = arith.constant 0 : index
    %1 = vector.load %arg2[%c0_1, %c0_2] : memref<128x128xf32, #tpu.memory_space<vmem>>, vector<128x128xf32>
    %cst = arith.constant dense<0.000000e+00> : vector<24x128xf32>
    %2 = tpu.matmul %0, %1, %cst {dimension_numbers = #tpu.dot_dimension_numbers<[1], [0], [0], [1], [0, 0, 1, 1], [], []>} : vector<24x128xf32>, vector<128x128xf32>, vector<24x128xf32> -> vector<24x128xf32>
    %c0_3 = arith.constant 0 : index
    %c0_4 = arith.constant 0 : index
    %3 = vector.load %arg3[%c0_3, %c0_4] : memref<1x128xf32, #tpu.memory_space<vmem>>, vector<1x128xf32>
    %4 = vector.broadcast %3 : vector<1x128xf32> to vector<24x128xf32>
    %5 = arith.addf %2, %4 : vector<24x128xf32>
    %6 = arith.negf %5 : vector<24x128xf32>
    %7 = math.exp %6 : vector<24x128xf32>
    %cst_5 = arith.constant 1.000000e+00 : f32
    %8 = vector.broadcast %cst_5 : f32 to vector<24x128xf32>
    %9 = arith.addf %8, %7 : vector<24x128xf32>
    %10 = arith.divf %8, %9 : vector<24x128xf32>
    %c0_6 = arith.constant 0 : index
    %c0_7 = arith.constant 0 : index
    %11 = vector.load %arg4[%c0_6, %c0_7] : memref<128x128xf32, #tpu.memory_space<vmem>>, vector<128x128xf32>
    %cst_8 = arith.constant dense<0.000000e+00> : vector<24x128xf32>
    %12 = tpu.matmul %10, %11, %cst_8 {dimension_numbers = #tpu.dot_dimension_numbers<[1], [0], [0], [1], [0, 0, 1, 1], [], []>} : vector<24x128xf32>, vector<128x128xf32>, vector<24x128xf32> -> vector<24x128xf32>
    %c0_9 = arith.constant 0 : index
    %c0_10 = arith.constant 0 : index
    %13 = vector.load %arg5[%c0_9, %c0_10] : memref<1x128xf32, #tpu.memory_space<vmem>>, vector<1x128xf32>
    %14 = vector.broadcast %13 : vector<1x128xf32> to vector<24x128xf32>
    %15 = arith.addf %12, %14 : vector<24x128xf32>
    %16 = arith.negf %15 : vector<24x128xf32>
    %17 = math.exp %16 : vector<24x128xf32>
    %cst_11 = arith.constant 1.000000e+00 : f32
    %18 = vector.broadcast %cst_11 : f32 to vector<24x128xf32>
    %19 = arith.addf %18, %17 : vector<24x128xf32>
    %20 = arith.divf %18, %19 : vector<24x128xf32>
    %c0_12 = arith.constant 0 : index
    %c0_13 = arith.constant 0 : index
    %21 = vector.load %arg6[%c0_12, %c0_13] : memref<128x128xf32, #tpu.memory_space<vmem>>, vector<128x128xf32>
    %cst_14 = arith.constant dense<0.000000e+00> : vector<24x128xf32>
    %22 = tpu.matmul %20, %21, %cst_14 {dimension_numbers = #tpu.dot_dimension_numbers<[1], [0], [0], [1], [0, 0, 1, 1], [], []>} : vector<24x128xf32>, vector<128x128xf32>, vector<24x128xf32> -> vector<24x128xf32>
    %c0_15 = arith.constant 0 : index
    %c0_16 = arith.constant 0 : index
    %23 = vector.load %arg7[%c0_15, %c0_16] : memref<1x128xf32, #tpu.memory_space<vmem>>, vector<1x128xf32>
    %24 = vector.broadcast %23 : vector<1x128xf32> to vector<24x128xf32>
    %25 = arith.addf %22, %24 : vector<24x128xf32>
    %26 = arith.negf %25 : vector<24x128xf32>
    %27 = math.exp %26 : vector<24x128xf32>
    %cst_17 = arith.constant 1.000000e+00 : f32
    %28 = vector.broadcast %cst_17 : f32 to vector<24x128xf32>
    %29 = arith.addf %28, %27 : vector<24x128xf32>
    %30 = arith.divf %28, %29 : vector<24x128xf32>
    %c0_18 = arith.constant 0 : index
    %c0_19 = arith.constant 0 : index
    %31 = vector.load %arg8[%c0_18, %c0_19] : memref<128x128xf32, #tpu.memory_space<vmem>>, vector<128x128xf32>
    %cst_20 = arith.constant dense<0.000000e+00> : vector<24x128xf32>
    %32 = tpu.matmul %30, %31, %cst_20 {dimension_numbers = #tpu.dot_dimension_numbers<[1], [0], [0], [1], [0, 0, 1, 1], [], []>} : vector<24x128xf32>, vector<128x128xf32>, vector<24x128xf32> -> vector<24x128xf32>
    %c0_21 = arith.constant 0 : index
    %c0_22 = arith.constant 0 : index
    %33 = vector.load %arg9[%c0_21, %c0_22] : memref<1x128xf32, #tpu.memory_space<vmem>>, vector<1x128xf32>
    %34 = vector.broadcast %33 : vector<1x128xf32> to vector<24x128xf32>
    %35 = arith.addf %32, %34 : vector<24x128xf32>
    %c0_23 = arith.constant 0 : index
    %c0_24 = arith.constant 0 : index
    %36 = vector.load %arg10[%c0_23, %c0_24] : memref<24x128xf32, #tpu.memory_space<vmem>>, vector<24x128xf32>
    tpu.vector_store %arg10[%c0_23, %c0_24], %35 {strides = array<i32>} : memref<24x128xf32, #tpu.memory_space<vmem>>, vector<24x128xf32>,
    return
  }
  func.func @transform_0(%arg0: i32) -> (i32, i32) {
    %c0_i32 = arith.constant 0 : i32
    %c0_i32_0 = arith.constant 0 : i32
    return %arg0, %c0_i32 : i32, i32
  }
  func.func @transform_1(%arg0: i32) -> (i32, i32) {
    %c0_i32 = arith.constant 0 : i32
    %c0_i32_0 = arith.constant 0 : i32
    %c0_i32_1 = arith.constant 0 : i32
    return %c0_i32, %c0_i32_0 : i32, i32
  }
  func.func @transform_2(%arg0: i32) -> (i32, i32) {
    %c0_i32 = arith.constant 0 : i32
    %c0_i32_0 = arith.constant 0 : i32
    %c0_i32_1 = arith.constant 0 : i32
    return %c0_i32, %c0_i32_0 : i32, i32
  }
  func.func @transform_3(%arg0: i32) -> (i32, i32) {
    %c0_i32 = arith.constant 0 : i32
    %c0_i32_0 = arith.constant 0 : i32
    %c0_i32_1 = arith.constant 0 : i32
    return %c0_i32, %c0_i32_0 : i32, i32
  }
  func.func @transform_4(%arg0: i32) -> (i32, i32) {
    %c0_i32 = arith.constant 0 : i32
    %c0_i32_0 = arith.constant 0 : i32
    %c0_i32_1 = arith.constant 0 : i32
    return %c0_i32, %c0_i32_0 : i32, i32
  }
  func.func @transform_5(%arg0: i32) -> (i32, i32) {
    %c0_i32 = arith.constant 0 : i32
    %c0_i32_0 = arith.constant 0 : i32
    %c0_i32_1 = arith.constant 0 : i32
    return %c0_i32, %c0_i32_0 : i32, i32
  }
  func.func @transform_6(%arg0: i32) -> (i32, i32) {
    %c0_i32 = arith.constant 0 : i32
    %c0_i32_0 = arith.constant 0 : i32
    %c0_i32_1 = arith.constant 0 : i32
    return %c0_i32, %c0_i32_0 : i32, i32
  }
  func.func @transform_7(%arg0: i32) -> (i32, i32) {
    %c0_i32 = arith.constant 0 : i32
    %c0_i32_0 = arith.constant 0 : i32
    %c0_i32_1 = arith.constant 0 : i32
    return %c0_i32, %c0_i32_0 : i32, i32
  }
  func.func @transform_8(%arg0: i32) -> (i32, i32) {
    %c0_i32 = arith.constant 0 : i32
    %c0_i32_0 = arith.constant 0 : i32
    %c0_i32_1 = arith.constant 0 : i32
    return %c0_i32, %c0_i32_0 : i32, i32
  }
  func.func @transform_9(%arg0: i32) -> (i32, i32) {
    %c0_i32 = arith.constant 0 : i32
    %c0_i32_0 = arith.constant 0 : i32
    return %arg0, %c0_i32 : i32, i32
  }
}

</mosaic_0001>

<llo_original>
// kernel: tpu_custom_call.1
$region0: #{tpu_custom_call.1}
  #allocation0 [shape = 'u32[]', space=smem, size = 0x4, offset = 0x4, fixed_abs, tag = 'smem constant byte address 0x4 - core index']
  #allocation1 [shape = 'u32[72,128]{1,0:T(1,128)}', space=vmem, size = 0x9000, scoped, tag = 'internal scratch']
  %s0 = inlined_call_operand.hbm [shape: f32[24,128], index: 0, kind: input, shape index: {}]
  %s1 = inlined_call_operand.hbm [shape: f32[128,128], index: 1, kind: input, shape index: {}]
  %s2 = inlined_call_operand.vmem [shape: f32[1,128], index: 2, kind: input, shape index: {}]
  %s3 = inlined_call_operand.hbm [shape: f32[128,128], index: 3, kind: input, shape index: {}]
  %s4 = inlined_call_operand.vmem [shape: f32[1,128], index: 4, kind: input, shape index: {}]
  %s5 = inlined_call_operand.hbm [shape: f32[128,128], index: 5, kind: input, shape index: {}]
  %s6 = inlined_call_operand.vmem [shape: f32[1,128], index: 6, kind: input, shape index: {}]
  %s7 = inlined_call_operand.hbm [shape: f32[128,128], index: 7, kind: input, shape index: {}]
  %s8 = inlined_call_operand.vmem [shape: f32[1,128], index: 8, kind: input, shape index: {}]
  %s9 = inlined_call_operand.hbm [shape: f32[24,128], index: 9, kind: output, shape index: {}]
  %s10 = sld [smem:[#allocation0]]
  $region66: #{tpu_custom_call.1} parent=0
    _
  %s12 = ssub.s32 1, %s10
  %s13 = scalar_select 0, %s12, %s10
  $region1: #{tpu_custom_call.1} parent=0
    #allocation2 [shape = 'u8[12288]{0}', space=vmem, size = 0x3000, scoped, tag = 'input window, operand 0, single buffered']
    #allocation3 [shape = 's32[1]{0}', space=sflag, size = 0x4, scoped, tag = 'scoped memory for tpu_custom_call.1']
    #allocation4 [shape = 's32[1]{0}', space=sflag, size = 0x4, scoped, tag = 'scoped memory for tpu_custom_call.1']
    #allocation5 [shape = 'u8[65536]{0}', space=vmem, size = 0x10000, scoped, tag = 'input window, operand 1, single buffered']
    #allocation6 [shape = 's32[1]{0}', space=sflag, size = 0x4, scoped, tag = 'scoped memory for tpu_custom_call.1']
    #allocation7 [shape = 'u8[65536]{0}', space=vmem, size = 0x10000, scoped, tag = 'input window, operand 3, single buffered']
    #allocation8 [shape = 'u8[65536]{0}', space=vmem, size = 0x10000, scoped, tag = 'input window, operand 5, single buffered']
    #allocation9 [shape = 's32[1]{0}', space=sflag, size = 0x4, scoped, tag = 'scoped memory for tpu_custom_call.1']
    #allocation10 [shape = 'u8[65536]{0}', space=vmem, size = 0x10000, scoped, tag = 'input window, operand 7, single buffered']
    #allocation11 [shape = 'u8[12288]{0}', space=vmem, size = 0x3000, scoped, tag = 'output window, operand 0, single buffered']
    %14 = vsyncpa [#allocation3], 0
    %15 = vsyncpa [#allocation6], 0
    %16 = vsyncpa [#allocation9], 0
    %17 = vsyncpa [#allocation4], 0
    // Predicated region
    $region2: #{tpu_custom_call.1} parent=1 // pred_check
      _
    $region3: #{tpu_custom_call.1} parent=1 // pred_check_branch
      %19 = sbr.rel (0) target = $region5
    $region4: #{tpu_custom_call.1} parent=1 // pred_region
      %21 = vsyncadd [#allocation3], 0
      %s22 = sshll.u32 %s0, 4
      %s23 = int_to_ptr.hbm [resolvable:$true] %s22
      %s24 = sshll.u32 [#allocation2], 4
      %s25 = int_to_ptr.vmem [resolvable:$true] %s24
      %30 = dma.hbm_to_vmem [thread:$0]  %s23, 384, %s25, [#allocation3], 128, 128, 8
    $region5: #{tpu_custom_call.1} parent=1 // pred_fallthru
      _
    // Predicated region
    $region6: #{tpu_custom_call.1} parent=1 // pred_check
      _
    $region7: #{tpu_custom_call.1} parent=1 // pred_check_branch
      %32 = sbr.rel (0) target = $region9
    $region8: #{tpu_custom_call.1} parent=1 // pred_region
      %34 = vsyncadd [#allocation6], 0
      %s35 = sshll.u32 %s1, 4
      %s36 = int_to_ptr.hbm [resolvable:$true] %s35
      %s37 = sshll.u32 [#allocation5], 4
      %s38 = int_to_ptr.vmem [resolvable:$true] %s37
      %43 = dma.hbm_to_vmem [thread:$0]  %s36, 2048, %s38, [#allocation6], 128, 128, 8
    $region9: #{tpu_custom_call.1} parent=1 // pred_fallthru
      _
    // Predicated region
    $region10: #{tpu_custom_call.1} parent=1 // pred_check
      _
    $region11: #{tpu_custom_call.1} parent=1 // pred_check_branch
      %45 = sbr.rel (0) target = $region13
    $region12: #{tpu_custom_call.1} parent=1 // pred_region
      _
    $region13: #{tpu_custom_call.1} parent=1 // pred_fallthru
      _
    // Predicated region
    $region14: #{tpu_custom_call.1} parent=1 // pred_check
      _
    $region15: #{tpu_custom_call.1} parent=1 // pred_check_branch
      %47 = sbr.rel (0) target = $region17
    $region16: #{tpu_custom_call.1} parent=1 // pred_region
      %49 = vsyncadd [#allocation6], 0
      %s50 = sshll.u32 %s3, 4
      %s51 = int_to_ptr.hbm [resolvable:$true] %s50
      %s52 = sshll.u32 [#allocation7], 4
      %s53 = int_to_ptr.vmem [resolvable:$true] %s52
      %58 = dma.hbm_to_vmem [thread:$0]  %s51, 2048, %s53, [#allocation6], 128, 128, 8
    $region17: #{tpu_custom_call.1} parent=1 // pred_fallthru
      _
    // Predicated region
    $region18: #{tpu_custom_call.1} parent=1 // pred_check
      _
    $region19: #{tpu_custom_call.1} parent=1 // pred_check_branch
      %60 = sbr.rel (0) target = $region21
    $region20: #{tpu_custom_call.1} parent=1 // pred_region
      _
    $region21: #{tpu_custom_call.1} parent=1 // pred_fallthru
      _
    // Predicated region
    $region22: #{tpu_custom_call.1} parent=1 // pred_check
      _
    $region23: #{tpu_custom_call.1} parent=1 // pred_check_branch
      %62 = sbr.rel (0) target = $region25
    $region24: #{tpu_custom_call.1} parent=1 // pred_region
      %64 = vsyncadd [#allocation9], 0
      %s65 = sshll.u32 %s5, 4
      %s66 = int_to_ptr.hbm [resolvable:$true] %s65
      %s67 = sshll.u32 [#allocation8], 4
      %s68 = int_to_ptr.vmem [resolvable:$true] %s67
      %73 = dma.hbm_to_vmem [thread:$0]  %s66, 2048, %s68, [#allocation9], 128, 128, 8
    $region25: #{tpu_custom_call.1} parent=1 // pred_fallthru
      _
    // Predicated region
    $region26: #{tpu_custom_call.1} parent=1 // pred_check
      _
    $region27: #{tpu_custom_call.1} parent=1 // pred_check_branch
      %75 = sbr.rel (0) target = $region29
    $region28: #{tpu_custom_call.1} parent=1 // pred_region
      _
    $region29: #{tpu_custom_call.1} parent=1 // pred_fallthru
      _
    // Predicated region
    $region30: #{tpu_custom_call.1} parent=1 // pred_check
      _
    $region31: #{tpu_custom_call.1} parent=1 // pred_check_branch
      %77 = sbr.rel (0) target = $region33
    $region32: #{tpu_custom_call.1} parent=1 // pred_region
      %79 = vsyncadd [#allocation9], 0
      %s80 = sshll.u32 %s7, 4
      %s81 = int_to_ptr.hbm [resolvable:$true] %s80
      %s82 = sshll.u32 [#allocation10], 4
      %s83 = int_to_ptr.vmem [resolvable:$true] %s82
      %88 = dma.hbm_to_vmem [thread:$0]  %s81, 2048, %s83, [#allocation9], 128, 128, 8
    $region33: #{tpu_custom_call.1} parent=1 // pred_fallthru
      _
    // Predicated region
    $region34: #{tpu_custom_call.1} parent=1 // pred_check
      _
    $region35: #{tpu_custom_call.1} parent=1 // pred_check_branch
      %90 = sbr.rel (0) target = $region37
    $region36: #{tpu_custom_call.1} parent=1 // pred_region
      _
    $region37: #{tpu_custom_call.1} parent=1 // pred_fallthru
      _
    // Predicated region
    $region38: #{tpu_custom_call.1} parent=1 // pred_check
      _
    $region39: #{tpu_custom_call.1} parent=1 // pred_check_branch
      %92 = sbr.rel (0) target = $region41
    $region40: #{tpu_custom_call.1} parent=1 // pred_region
      %94 = dma.done [#allocation3], 384
    $region41: #{tpu_custom_call.1} parent=1 // pred_fallthru
      _
    // Predicated region
    $region42: #{tpu_custom_call.1} parent=1 // pred_check
      _
    $region43: #{tpu_custom_call.1} parent=1 // pred_check_branch
      %96 = sbr.rel (0) target = $region45
    $region44: #{tpu_custom_call.1} parent=1 // pred_region
      %98 = dma.done [#allocation6], 2048
    $region45: #{tpu_custom_call.1} parent=1 // pred_fallthru
      _
    // Predicated region
    $region46: #{tpu_custom_call.1} parent=1 // pred_check
      _
    $region47: #{tpu_custom_call.1} parent=1 // pred_check_branch
      %100 = sbr.rel (0) target = $region49
    $region48: #{tpu_custom_call.1} parent=1 // pred_region
      %102 = dma.done [#allocation6], 2048
    $region49: #{tpu_custom_call.1} parent=1 // pred_fallthru
      _
    // Predicated region
    $region50: #{tpu_custom_call.1} parent=1 // pred_check
      _
    $region51: #{tpu_custom_call.1} parent=1 // pred_check_branch
      %104 = sbr.rel (0) target = $region53
    $region52: #{tpu_custom_call.1} parent=1 // pred_region
      %106 = dma.done [#allocation9], 2048
    $region53: #{tpu_custom_call.1} parent=1 // pred_fallthru
      _
    // Predicated region
    $region54: #{tpu_custom_call.1} parent=1 // pred_check
      _
    $region55: #{tpu_custom_call.1} parent=1 // pred_check_branch
      %108 = sbr.rel (0) target = $region57
    $region56: #{tpu_custom_call.1} parent=1 // pred_region
      %110 = dma.done [#allocation9], 2048
    $region57: #{tpu_custom_call.1} parent=1 // pred_fallthru
      _
    %v111 = vld [vmem:[#allocation2] sm:$0xff]
    %v112 = vld [vmem:[#allocation2 + $0x8] sm:$0xff]
    %v113 = vld [vmem:[#allocation2 + $0x10] sm:$0xff]
    %v114 = vld [vmem:[#allocation5] sm:$0xff]
    %v115 = vld [vmem:[#allocation5 + $0x8] sm:$0xff]
    %v116 = vld [vmem:[#allocation5 + $0x10] sm:$0xff]
    %v117 = vld [vmem:[#allocation5 + $0x18] sm:$0xff]
    %v118 = vld [vmem:[#allocation5 + $0x20] sm:$0xff]
    %v119 = vld [vmem:[#allocation5 + $0x28] sm:$0xff]
    %v120 = vld [vmem:[#allocation5 + $0x30] sm:$0xff]
    %v121 = vld [vmem:[#allocation5 + $0x38] sm:$0xff]
    %v122 = vld [vmem:[#allocation5 + $0x40] sm:$0xff]
    %v123 = vld [vmem:[#allocation5 + $0x48] sm:$0xff]
    %v124 = vld [vmem:[#allocation5 + $0x50] sm:$0xff]
    %v125 = vld [vmem:[#allocation5 + $0x58] sm:$0xff]
    %v126 = vld [vmem:[#allocation5 + $0x60] sm:$0xff]
    %v127 = vld [vmem:[#allocation5 + $0x68] sm:$0xff]
    %v128 = vld [vmem:[#allocation5 + $0x70] sm:$0xff]
    %v129 = vld [vmem:[#allocation5 + $0x78] sm:$0xff]
    %v130 = vld [vmem:[%s2] sm:$0x1]
    %v132 = vperm.slane %v130, 0
    %134 = vmatpush.msra.mxu0 %v129
    %135 = vmatpush.msra.mxu0 %v128
    %136 = vmatpush.msra.mxu0 %v127
    %137 = vmatpush.msra.mxu0 %v126
    %138 = vmatpush.msra.mxu0 %v125
    %139 = vmatpush.msra.mxu0 %v124
    %140 = vmatpush.msra.mxu0 %v123
    %141 = vmatpush.msra.mxu0 %v122
    %142 = vmatpush.msra.mxu0 %v121
    %143 = vmatpush.msra.mxu0 %v120
    %144 = vmatpush.msra.mxu0 %v119
    %145 = vmatpush.msra.mxu0 %v118
    %146 = vmatpush.msra.mxu0 %v117
    %147 = vmatpush.msra.mxu0 %v116
    %148 = vmatpush.msra.mxu0 %v115
    %149 = vmatpush.msra.mxu0 %v114
    %150 = vmatmul.f32.gmra.mxu0 %v111
    %v151 = vpop.f32.mrf.mxu0
    %v152 = vadd.f32 %v132, %v151
    %153 = vmatmul.f32.gmra.mxu0 %v112
    %v154 = vpop.f32.mrf.mxu0
    %v155 = vadd.f32 %v132, %v154
    %156 = vmatmul.f32.gmra.mxu0 %v113
    %v157 = vpop.f32.mrf.mxu0
    %v158 = vadd.f32 %v132, %v157
    %159 = vdwg.mxu0
    %v160 = vxor.u32 %v152, 2147483648
    %v161 = vxor.u32 %v155, 2147483648
    %v162 = vxor.u32 %v158, 2147483648
    %v163 = vmul.f32 %v160, 1.442695
    %v164 = vpow.pop %v163
    %v165 = vmul.f32 %v161, 1.442695
    %v166 = vpow.pop %v165
    %v167 = vmul.f32 %v162, 1.442695
    %v168 = vpow.pop %v167
    %v169 = vadd.f32 %v164, 1.0
    %v170 = vadd.f32 %v166, 1.0
    %v171 = vadd.f32 %v168, 1.0
    %v172 = vrcp.pop %v169
    %v173 = vmul.f32 %v169, %v172
    %v174 = vsub.f32 1.0, %v173
    %v175 = vmul.f32 %v172, %v174
    %v176 = vadd.f32 %v172, %v175
    %vm177 = vweird.f32 %v169
    %vm178 = vweird.f32 %v172
    %vm179 = vmor %vm177, %vm178
    %v180 = vsel %vm179, %v172, %v176
    %v181 = vand.u32 2147483647, %v169
    %vm182 = vcmp.eq.f32.partialorder %v181, 8.507059e+37
    %v183 = vand.u32 %v169, 2147483648
    %v184 = vor.u32 1.1754944e-38, %v183
    %v185 = vsel %vm182, %v184, %v180
    %v186 = vmul.f32 1.0, %v185
    %v187 = vrcp.pop %v170
    %v188 = vmul.f32 %v170, %v187
    %v189 = vsub.f32 1.0, %v188
    %v190 = vmul.f32 %v187, %v189
    %v191 = vadd.f32 %v187, %v190
    %vm192 = vweird.f32 %v170
    %vm193 = vweird.f32 %v187
    %vm194 = vmor %vm192, %vm193
    %v195 = vsel %vm194, %v187, %v191
    %v196 = vand.u32 2147483647, %v170
    %vm197 = vcmp.eq.f32.partialorder %v196, 8.507059e+37
    %v198 = vand.u32 %v170, 2147483648
    %v199 = vor.u32 1.1754944e-38, %v198
    %v200 = vsel %vm197, %v199, %v195
    %v201 = vmul.f32 1.0, %v200
    %v202 = vrcp.pop %v171
    %v203 = vmul.f32 %v171, %v202
    %v204 = vsub.f32 1.0, %v203
    %v205 = vmul.f32 %v202, %v204
    %v206 = vadd.f32 %v202, %v205
    %vm207 = vweird.f32 %v171
    %vm208 = vweird.f32 %v202
    %vm209 = vmor %vm207, %vm208
    %v210 = vsel %vm209, %v202, %v206
    %v211 = vand.u32 2147483647, %v171
    %vm212 = vcmp.eq.f32.partialorder %v211, 8.507059e+37
    %v213 = vand.u32 %v171, 2147483648
    %v214 = vor.u32 1.1754944e-38, %v213
    %v215 = vsel %vm212, %v214, %v210
    %v216 = vmul.f32 1.0, %v215
    %v217 = vld [vmem:[#allocation7] sm:$0xff]
    %v218 = vld [vmem:[#allocation7 + $0x8] sm:$0xff]
    %v219 = vld [vmem:[#allocation7 + $0x10] sm:$0xff]
    %v220 = vld [vmem:[#allocation7 + $0x18] sm:$0xff]
    %v221 = vld [vmem:[#allocation7 + $0x20] sm:$0xff]
    %v222 = vld [vmem:[#allocation7 + $0x28] sm:$0xff]
    %v223 = vld [vmem:[#allocation7 + $0x30] sm:$0xff]
    %v224 = vld [vmem:[#allocation7 + $0x38] sm:$0xff]
    %v225 = vld [vmem:[#allocation7 + $0x40] sm:$0xff]
    %v226 = vld [vmem:[#allocation7 + $0x48] sm:$0xff]
    %v227 = vld [vmem:[#allocation7 + $0x50] sm:$0xff]
    %v228 = vld [vmem:[#allocation7 + $0x58] sm:$0xff]
    %v229 = vld [vmem:[#allocation7 + $0x60] sm:$0xff]
    %v230 = vld [vmem:[#allocation7 + $0x68] sm:$0xff]
    %v231 = vld [vmem:[#allocation7 + $0x70] sm:$0xff]
    %v232 = vld [vmem:[#allocation7 + $0x78] sm:$0xff]
    %v233 = vld [vmem:[%s4] sm:$0x1]
    %v235 = vperm.slane %v233, 0
    %237 = vmatpush.msra.mxu0 %v232
    %238 = vmatpush.msra.mxu0 %v231
    %239 = vmatpush.msra.mxu0 %v230
    %240 = vmatpush.msra.mxu0 %v229
    %241 = vmatpush.msra.mxu0 %v228
    %242 = vmatpush.msra.mxu0 %v227
    %243 = vmatpush.msra.mxu0 %v226
    %244 = vmatpush.msra.mxu0 %v225
    %245 = vmatpush.msra.mxu0 %v224
    %246 = vmatpush.msra.mxu0 %v223
    %247 = vmatpush.msra.mxu0 %v222
    %248 = vmatpush.msra.mxu0 %v221
    %249 = vmatpush.msra.mxu0 %v220
    %250 = vmatpush.msra.mxu0 %v219
    %251 = vmatpush.msra.mxu0 %v218
    %252 = vmatpush.msra.mxu0 %v217
    %253 = vmatmul.f32.gmra.mxu0 %v186
    %v254 = vpop.f32.mrf.mxu0
    %v255 = vadd.f32 %v235, %v254
    %256 = vmatmul.f32.gmra.mxu0 %v201
    %v257 = vpop.f32.mrf.mxu0
    %v258 = vadd.f32 %v235, %v257
    %259 = vmatmul.f32.gmra.mxu0 %v216
    %v260 = vpop.f32.mrf.mxu0
    %v261 = vadd.f32 %v235, %v260
    %262 = vdwg.mxu0
    %v263 = vxor.u32 %v255, 2147483648
    %v264 = vxor.u32 %v258, 2147483648
    %v265 = vxor.u32 %v261, 2147483648
    %v266 = vmul.f32 %v263, 1.442695
    %v267 = vpow.pop %v266
    %v268 = vmul.f32 %v264, 1.442695
    %v269 = vpow.pop %v268
    %v270 = vmul.f32 %v265, 1.442695
    %v271 = vpow.pop %v270
    %v272 = vadd.f32 %v267, 1.0
    %v273 = vadd.f32 %v269, 1.0
    %v274 = vadd.f32 %v271, 1.0
    %v275 = vrcp.pop %v272
    %v276 = vmul.f32 %v272, %v275
    %v277 = vsub.f32 1.0, %v276
    %v278 = vmul.f32 %v275, %v277
    %v279 = vadd.f32 %v275, %v278
    %vm280 = vweird.f32 %v272
    %vm281 = vweird.f32 %v275
    %vm282 = vmor %vm280, %vm281
    %v283 = vsel %vm282, %v275, %v279
    %v284 = vand.u32 2147483647, %v272
    %vm285 = vcmp.eq.f32.partialorder %v284, 8.507059e+37
    %v286 = vand.u32 %v272, 2147483648
    %v287 = vor.u32 1.1754944e-38, %v286
    %v288 = vsel %vm285, %v287, %v283
    %v289 = vmul.f32 1.0, %v288
    %v290 = vrcp.pop %v273
    %v291 = vmul.f32 %v273, %v290
    %v292 = vsub.f32 1.0, %v291
    %v293 = vmul.f32 %v290, %v292
    %v294 = vadd.f32 %v290, %v293
    %vm295 = vweird.f32 %v273
    %vm296 = vweird.f32 %v290
    %vm297 = vmor %vm295, %vm296
    %v298 = vsel %vm297, %v290, %v294
    %v299 = vand.u32 2147483647, %v273
    %vm300 = vcmp.eq.f32.partialorder %v299, 8.507059e+37
    %v301 = vand.u32 %v273, 2147483648
    %v302 = vor.u32 1.1754944e-38, %v301
    %v303 = vsel %vm300, %v302, %v298
    %v304 = vmul.f32 1.0, %v303
    %v305 = vrcp.pop %v274
    %v306 = vmul.f32 %v274, %v305
    %v307 = vsub.f32 1.0, %v306
    %v308 = vmul.f32 %v305, %v307
    %v309 = vadd.f32 %v305, %v308
    %vm310 = vweird.f32 %v274
    %vm311 = vweird.f32 %v305
    %vm312 = vmor %vm310, %vm311
    %v313 = vsel %vm312, %v305, %v309
    %v314 = vand.u32 2147483647, %v274
    %vm315 = vcmp.eq.f32.partialorder %v314, 8.507059e+37
    %v316 = vand.u32 %v274, 2147483648
    %v317 = vor.u32 1.1754944e-38, %v316
    %v318 = vsel %vm315, %v317, %v313
    %v319 = vmul.f32 1.0, %v318
    %v320 = vld [vmem:[#allocation8] sm:$0xff]
    %v321 = vld [vmem:[#allocation8 + $0x8] sm:$0xff]
    %v322 = vld [vmem:[#allocation8 + $0x10] sm:$0xff]
    %v323 = vld [vmem:[#allocation8 + $0x18] sm:$0xff]
    %v324 = vld [vmem:[#allocation8 + $0x20] sm:$0xff]
    %v325 = vld [vmem:[#allocation8 + $0x28] sm:$0xff]
    %v326 = vld [vmem:[#allocation8 + $0x30] sm:$0xff]
    %v327 = vld [vmem:[#allocation8 + $0x38] sm:$0xff]
    %v328 = vld [vmem:[#allocation8 + $0x40] sm:$0xff]
    %v329 = vld [vmem:[#allocation8 + $0x48] sm:$0xff]
    %v330 = vld [vmem:[#allocation8 + $0x50] sm:$0xff]
    %v331 = vld [vmem:[#allocation8 + $0x58] sm:$0xff]
    %v332 = vld [vmem:[#allocation8 + $0x60] sm:$0xff]
    %v333 = vld [vmem:[#allocation8 + $0x68] sm:$0xff]
    %v334 = vld [vmem:[#allocation8 + $0x70] sm:$0xff]
    %v335 = vld [vmem:[#allocation8 + $0x78] sm:$0xff]
    %v336 = vld [vmem:[%s6] sm:$0x1]
    %v338 = vperm.slane %v336, 0
    %340 = vmatpush.msra.mxu0 %v335
    %341 = vmatpush.msra.mxu0 %v334
    %342 = vmatpush.msra.mxu0 %v333
    %343 = vmatpush.msra.mxu0 %v332
    %344 = vmatpush.msra.mxu0 %v331
    %345 = vmatpush.msra.mxu0 %v330
    %346 = vmatpush.msra.mxu0 %v329
    %347 = vmatpush.msra.mxu0 %v328
    %348 = vmatpush.msra.mxu0 %v327
    %349 = vmatpush.msra.mxu0 %v326
    %350 = vmatpush.msra.mxu0 %v325
    %351 = vmatpush.msra.mxu0 %v324
    %352 = vmatpush.msra.mxu0 %v323
    %353 = vmatpush.msra.mxu0 %v322
    %354 = vmatpush.msra.mxu0 %v321
    %355 = vmatpush.msra.mxu0 %v320
    %356 = vmatmul.f32.gmra.mxu0 %v289
    %v357 = vpop.f32.mrf.mxu0
    %v358 = vadd.f32 %v338, %v357
    %359 = vmatmul.f32.gmra.mxu0 %v304
    %v360 = vpop.f32.mrf.mxu0
    %v361 = vadd.f32 %v338, %v360
    %362 = vmatmul.f32.gmra.mxu0 %v319
    %v363 = vpop.f32.mrf.mxu0
    %v364 = vadd.f32 %v338, %v363
    %365 = vdwg.mxu0
    %v366 = vxor.u32 %v358, 2147483648
    %v367 = vxor.u32 %v361, 2147483648
    %v368 = vxor.u32 %v364, 2147483648
    %v369 = vmul.f32 %v366, 1.442695
    %v370 = vpow.pop %v369
    %v371 = vmul.f32 %v367, 1.442695
    %v372 = vpow.pop %v371
    %v373 = vmul.f32 %v368, 1.442695
    %v374 = vpow.pop %v373
    %v375 = vadd.f32 %v370, 1.0
    %v376 = vadd.f32 %v372, 1.0
    %v377 = vadd.f32 %v374, 1.0
    %v378 = vrcp.pop %v375
    %v379 = vmul.f32 %v375, %v378
    %v380 = vsub.f32 1.0, %v379
    %v381 = vmul.f32 %v378, %v380
    %v382 = vadd.f32 %v378, %v381
    %vm383 = vweird.f32 %v375
    %vm384 = vweird.f32 %v378
    %vm385 = vmor %vm383, %vm384
    %v386 = vsel %vm385, %v378, %v382
    %v387 = vand.u32 2147483647, %v375
    %vm388 = vcmp.eq.f32.partialorder %v387, 8.507059e+37
    %v389 = vand.u32 %v375, 2147483648
    %v390 = vor.u32 1.1754944e-38, %v389
    %v391 = vsel %vm388, %v390, %v386
    %v392 = vmul.f32 1.0, %v391
    %v393 = vrcp.pop %v376
    %v394 = vmul.f32 %v376, %v393
    %v395 = vsub.f32 1.0, %v394
    %v396 = vmul.f32 %v393, %v395
    %v397 = vadd.f32 %v393, %v396
    %vm398 = vweird.f32 %v376
    %vm399 = vweird.f32 %v393
    %vm400 = vmor %vm398, %vm399
    %v401 = vsel %vm400, %v393, %v397
    %v402 = vand.u32 2147483647, %v376
    %vm403 = vcmp.eq.f32.partialorder %v402, 8.507059e+37
    %v404 = vand.u32 %v376, 2147483648
    %v405 = vor.u32 1.1754944e-38, %v404
    %v406 = vsel %vm403, %v405, %v401
    %v407 = vmul.f32 1.0, %v406
    %v408 = vrcp.pop %v377
    %v409 = vmul.f32 %v377, %v408
    %v410 = vsub.f32 1.0, %v409
    %v411 = vmul.f32 %v408, %v410
    %v412 = vadd.f32 %v408, %v411
    %vm413 = vweird.f32 %v377
    %vm414 = vweird.f32 %v408
    %vm415 = vmor %vm413, %vm414
    %v416 = vsel %vm415, %v408, %v412
    %v417 = vand.u32 2147483647, %v377
    %vm418 = vcmp.eq.f32.partialorder %v417, 8.507059e+37
    %v419 = vand.u32 %v377, 2147483648
    %v420 = vor.u32 1.1754944e-38, %v419
    %v421 = vsel %vm418, %v420, %v416
    %v422 = vmul.f32 1.0, %v421
    %v423 = vld [vmem:[#allocation10] sm:$0xff]
    %v424 = vld [vmem:[#allocation10 + $0x8] sm:$0xff]
    %v425 = vld [vmem:[#allocation10 + $0x10] sm:$0xff]
    %v426 = vld [vmem:[#allocation10 + $0x18] sm:$0xff]
    %v427 = vld [vmem:[#allocation10 + $0x20] sm:$0xff]
    %v428 = vld [vmem:[#allocation10 + $0x28] sm:$0xff]
    %v429 = vld [vmem:[#allocation10 + $0x30] sm:$0xff]
    %v430 = vld [vmem:[#allocation10 + $0x38] sm:$0xff]
    %v431 = vld [vmem:[#allocation10 + $0x40] sm:$0xff]
    %v432 = vld [vmem:[#allocation10 + $0x48] sm:$0xff]
    %v433 = vld [vmem:[#allocation10 + $0x50] sm:$0xff]
    %v434 = vld [vmem:[#allocation10 + $0x58] sm:$0xff]
    %v435 = vld [vmem:[#allocation10 + $0x60] sm:$0xff]
    %v436 = vld [vmem:[#allocation10 + $0x68] sm:$0xff]
    %v437 = vld [vmem:[#allocation10 + $0x70] sm:$0xff]
    %v438 = vld [vmem:[#allocation10 + $0x78] sm:$0xff]
    %v439 = vld [vmem:[%s8] sm:$0x1]
    %v441 = vperm.slane %v439, 0
    %443 = vmatpush.msra.mxu0 %v438
    %444 = vmatpush.msra.mxu0 %v437
    %445 = vmatpush.msra.mxu0 %v436
    %446 = vmatpush.msra.mxu0 %v435
    %447 = vmatpush.msra.mxu0 %v434
    %448 = vmatpush.msra.mxu0 %v433
    %449 = vmatpush.msra.mxu0 %v432
    %450 = vmatpush.msra.mxu0 %v431
    %451 = vmatpush.msra.mxu0 %v430
    %452 = vmatpush.msra.mxu0 %v429
    %453 = vmatpush.msra.mxu0 %v428
    %454 = vmatpush.msra.mxu0 %v427
    %455 = vmatpush.msra.mxu0 %v426
    %456 = vmatpush.msra.mxu0 %v425
    %457 = vmatpush.msra.mxu0 %v424
    %458 = vmatpush.msra.mxu0 %v423
    %459 = vmatmul.f32.gmra.mxu0 %v392
    %v460 = vpop.f32.mrf.mxu0
    %v461 = vadd.f32 %v441, %v460
    %462 = vmatmul.f32.gmra.mxu0 %v407
    %v463 = vpop.f32.mrf.mxu0
    %v464 = vadd.f32 %v441, %v463
    %465 = vmatmul.f32.gmra.mxu0 %v422
    %v466 = vpop.f32.mrf.mxu0
    %v467 = vadd.f32 %v441, %v466
    %468 = vdwg.mxu0
    %469 = vst [vmem:[#allocation11] sm:$0xff] %v461
    %470 = vst [vmem:[#allocation11 + $0x8] sm:$0xff] %v464
    %471 = vst [vmem:[#allocation11 + $0x10] sm:$0xff] %v467
    // Predicated region
    $region58: #{tpu_custom_call.1} parent=1 // pred_check
      _
    $region59: #{tpu_custom_call.1} parent=1 // pred_check_branch
      %473 = sbr.rel (0) target = $region61
    $region60: #{tpu_custom_call.1} parent=1 // pred_region
      %475 = vsyncadd [#allocation4], 0
      %s476 = sshll.u32 [#allocation11], 4
      %s477 = int_to_ptr.vmem [resolvable:$true] %s476
      %s478 = sshll.u32 %s9, 4
      %s479 = int_to_ptr.hbm [resolvable:$true] %s478
      %484 = dma.vmem_to_hbm [thread:$0]  %s477, 384, %s479, [#allocation4], 128, 128, 8
    $region61: #{tpu_custom_call.1} parent=1 // pred_fallthru
      _
    // Predicated region
    $region62: #{tpu_custom_call.1} parent=1 // pred_check
      _
    $region63: #{tpu_custom_call.1} parent=1 // pred_check_branch
      %486 = sbr.rel (0) target = $region65
    $region64: #{tpu_custom_call.1} parent=1 // pred_region
      %488 = dma.done [#allocation4], 384
    $region65: #{tpu_custom_call.1} parent=1 // pred_fallthru
      _
    %489 = vsyncpa [#allocation3], 1
    %490 = vsyncpa [#allocation6], 1
    %491 = vsyncpa [#allocation9], 1
    %492 = vsyncpa [#allocation4], 1

</llo_original>
